<compile_context>
chip_gen: v7x
topology: tpu7x:2x2x1
jax: 0.10.0
libtpu: 0.0.40
codegen_flags: <defaults>
</compile_context>

<pallas_src>
import functools

import jax
import jax.numpy as jnp
from jax.experimental import pallas as pl
from jax.experimental.pallas import tpu as pltpu


def _round_up(x, m):
    return ((x + m - 1) // m) * m


def fourier_noise_kernel(a_ref, fp_ref, o_ref):
    # a_ref:  (tm, 1)   tile of the flattened noise levels (f32)
    # fp_ref: (2, D)    row 0 = 2*pi*freq, row 1 = 2*pi*phi (VMEM-resident)
    # o_ref:  (tm, D)
    a = a_ref[...]                 # (tm, 1)
    f2 = fp_ref[0:1, :]            # (1, D) -> broadcast over rows
    p2 = fp_ref[1:2, :]            # (1, D)
    # Rank-1 outer product via VPU broadcast; cos goes to the EUP/VALU.
    o_ref[...] = jnp.cos(a * f2 + p2).astype(o_ref.dtype)


def _vmem_budget_bytes():
    # Generation-aware budget: v5e/v6e have 128 MiB physical VMEM, v7x 64 MiB.
    try:
        phys = int(pltpu.get_tpu_info().vmem_capacity_bytes)
    except Exception:
        phys = 64 * 1024 * 1024  # conservative (v7x-sized) fallback
    # Leave headroom for Mosaic-internal scratch; cap at 64 MiB (plenty for
    # overhead-amortizing tiles on any generation).
    return min(64 * 1024 * 1024, (phys * 3) // 4)


@functools.partial(jax.jit, static_argnames=("tm", "out_dtype"))
def fourier_noise_embedding(a, freq, phi, *, tm=4096, out_dtype=jnp.float32):
    """Pallas equivalent of FourierNoiseEmbedding.forward.

    a:    any shape, flattened to (N, 1)
    freq: (1, cond_dim) or (cond_dim,)
    phi:  (cond_dim,)
    returns (N, cond_dim) in `out_dtype`
    """
    a_flat = a.reshape(-1, 1).astype(jnp.float32)
    N = a_flat.shape[0]
    D = freq.shape[-1]

    # Fold 2*pi into the tiny (2, D) constant once (one fewer vmul per vreg),
    # and pack freq/phi into a single replicated input (one DMA channel).
    two_pi = jnp.float32(2.0 * jnp.pi)
    fp = jnp.stack(
        [two_pi * freq.reshape(-1).astype(jnp.float32),
         two_pi * phi.reshape(-1).astype(jnp.float32)],
        axis=0)  # (2, D)

    out_itemsize = jnp.dtype(out_dtype).itemsize
    # Sublane multiple of the output tile (f32: 8, bf16: 16, int8/fp8: 32).
    row_mult = max(8, 32 // out_itemsize)

    # ---- VMEM accounting (includes the lane-padded noise-level tile) -------
    # Per tile row, resident bytes:
    #   * output tile, double-buffered, lane-padded to 128 lanes:
    #       2 * round_up(D, 128) * itemsize(out_dtype)
    #   * (tm, 1) f32 input tile is stored lane-padded to 128 lanes,
    #     double-buffered:  2 * 128 * 4
    budget = _vmem_budget_bytes()
    d_lanes = _round_up(D, 128)
    bytes_per_row = 2 * d_lanes * out_itemsize + 2 * 128 * 4
    fixed_bytes = 2 * 8 * d_lanes * 4 + (1 << 20)  # fp buffers + slack
    tm_cap = (budget - fixed_bytes) // bytes_per_row
    tm_cap = max(row_mult, (tm_cap // row_mult) * row_mult)

    tm_eff = min(tm, tm_cap, _round_up(N, row_mult))
    tm_eff = max(row_mult, (tm_eff // row_mult) * row_mult)

    # Keep >= 2 grid steps (v7x has 2 TensorCores) as long as each step still
    # writes a large (>= 2 MiB) output tile; harmless on single-TC chips.
    half = _round_up((N + 1) // 2, row_mult)
    if half * d_lanes * out_itemsize >= (2 << 20):
        tm_eff = min(tm_eff, half)

    grid = (pl.cdiv(N, tm_eff),)

    # No padding / no epilogue slice: output shape is exactly (N, D); the last
    # (possibly partial) block is clipped by Pallas on write-back.
    out = pl.pallas_call(
        fourier_noise_kernel,
        out_shape=jax.ShapeDtypeStruct((N, D), out_dtype),
        grid_spec=pltpu.PrefetchScalarGridSpec(
            num_scalar_prefetch=0,
            grid=grid,
            in_specs=[
                pl.BlockSpec((tm_eff, 1), lambda i: (i, 0)),   # noise levels
                pl.BlockSpec((2, D), lambda i: (0, 0)),        # 2*pi*freq / 2*pi*phi
            ],
            out_specs=pl.BlockSpec((tm_eff, D), lambda i: (i, 0)),
        ),
        compiler_params=pltpu.CompilerParams(
            dimension_semantics=("parallel",),
            vmem_limit_bytes=int(budget),
        ),
    )(a_flat, fp)

    return out


if __name__ == "__main__":
    cond_dim = 128          # lane-aligned "hidden" size
    key = jax.random.PRNGKey(0)
    k_freq, k_phi, k_a = jax.random.split(key, 3)

    # Deterministic parameter init (mirrors torch.randn(cond_dim).view(1,-1)
    # and torch.rand(cond_dim)).
    freq = jax.random.normal(k_freq, (1, cond_dim), dtype=jnp.float32)
    phi = jax.random.uniform(k_phi, (cond_dim,), dtype=jnp.float32)

    # Example noise-level input; forward flattens it to (-1, 1).
    a = jax.random.normal(k_a, (2, 8), dtype=jnp.float32)

    out = jax.block_until_ready(fourier_noise_embedding(a, freq, phi))
    ref = jnp.cos(2.0 * jnp.pi * (a.reshape(-1, 1) @ freq + phi))
    assert out.shape == (16, cond_dim)
    assert jnp.allclose(out, ref, atol=1e-4, rtol=1e-5)

    # Ragged-N case (N=105 not a multiple of the tile) — exercises the partial
    # last block with no epilogue slice.
    a2 = jax.random.normal(jax.random.PRNGKey(1), (3, 7, 5), dtype=jnp.float32)
    out2 = jax.block_until_ready(fourier_noise_embedding(a2, freq, phi))
    ref2 = jnp.cos(2.0 * jnp.pi * (a2.reshape(-1, 1) @ freq + phi))
    assert out2.shape == (3 * 7 * 5, cond_dim)
    assert jnp.allclose(out2, ref2, atol=1e-4, rtol=1e-5)

    # Non-128 feature dim (block last dim == full array dim, masked stores).
    cond_dim3 = 96
    k3f, k3p, k3a = jax.random.split(jax.random.PRNGKey(2), 3)
    freq3 = jax.random.normal(k3f, (1, cond_dim3), dtype=jnp.float32)
    phi3 = jax.random.uniform(k3p, (cond_dim3,), dtype=jnp.float32)
    a3 = jax.random.normal(k3a, (4, 3), dtype=jnp.float32)
    out3 = jax.block_until_ready(fourier_noise_embedding(a3, freq3, phi3))
    ref3 = jnp.cos(2.0 * jnp.pi * (a3.reshape(-1, 1) @ freq3 + phi3))
    assert out3.shape == (12, cond_dim3)
    assert jnp.allclose(out3, ref3, atol=1e-4, rtol=1e-5)

    print("KERNEL_OK")
</pallas_src>

<mosaic_0001>
module attributes {stable_mosaic.version = 11 : i64} {
  func.func @fourier_noise_kernel(%arg0: i32, %arg1: memref<16x1xf32, #tpu.memory_space<vmem>>, %arg2: memref<2x128xf32, #tpu.memory_space<vmem>>, %arg3: memref<16x128xf32, #tpu.memory_space<vmem>>) attributes {dimension_semantics = [#tpu.dimension_semantics<parallel>], iteration_bounds = array<i64: 1>, scalar_prefetch = 0 : i64, scratch_operands = 0 : i64, tpu.core_type = #tpu.core_type<tc>, window_params = [{transform_indices = @transform_0, window_bounds = array<i64: 16, 1>}, {pipeline_mode = #tpu.pipeline_mode<synchronous>, transform_indices = @transform_1, window_bounds = array<i64: 2, 128>}, {transform_indices = @transform_2, window_bounds = array<i64: 16, 128>}]} {
    %c0 = arith.constant 0 : index
    %c0_0 = arith.constant 0 : index
    %0 = vector.load %arg1[%c0, %c0_0] : memref<16x1xf32, #tpu.memory_space<vmem>>, vector<16x1xf32>
    %c0_1 = arith.constant 0 : index
    %c0_2 = arith.constant 0 : index
    %1 = vector.load %arg2[%c0_1, %c0_2] : memref<2x128xf32, #tpu.memory_space<vmem>>, vector<1x128xf32>
    %c1 = arith.constant 1 : index
    %c0_3 = arith.constant 0 : index
    %2 = vector.load %arg2[%c1, %c0_3] : memref<2x128xf32, #tpu.memory_space<vmem>>, vector<1x128xf32>
    %3 = vector.broadcast %0 : vector<16x1xf32> to vector<16x128xf32>
    %4 = vector.broadcast %1 : vector<1x128xf32> to vector<16x128xf32>
    %5 = arith.mulf %3, %4 : vector<16x128xf32>
    %6 = vector.broadcast %2 : vector<1x128xf32> to vector<16x128xf32>
    %7 = arith.addf %5, %6 : vector<16x128xf32>
    %8 = math.cos %7 : vector<16x128xf32>
    %c0_4 = arith.constant 0 : index
    %c0_5 = arith.constant 0 : index
    %9 = vector.load %arg3[%c0_4, %c0_5] : memref<16x128xf32, #tpu.memory_space<vmem>>, vector<16x128xf32>
    tpu.vector_store %arg3[%c0_4, %c0_5], %8 {strides = array<i32>} : memref<16x128xf32, #tpu.memory_space<vmem>>, vector<16x128xf32>,
    return
  }
  func.func @transform_0(%arg0: i32) -> (i32, i32) {
    %c0_i32 = arith.constant 0 : i32
    %c0_i32_0 = arith.constant 0 : i32
    return %arg0, %c0_i32 : i32, i32
  }
  func.func @transform_1(%arg0: i32) -> (i32, i32) {
    %c0_i32 = arith.constant 0 : i32
    %c0_i32_0 = arith.constant 0 : i32
    %c0_i32_1 = arith.constant 0 : i32
    return %c0_i32, %c0_i32_0 : i32, i32
  }
  func.func @transform_2(%arg0: i32) -> (i32, i32) {
    %c0_i32 = arith.constant 0 : i32
    %c0_i32_0 = arith.constant 0 : i32
    return %arg0, %c0_i32 : i32, i32
  }
}

</mosaic_0001>

<llo_original>
// kernel: fourier_noise_embedding.1
$region0: #{fourier_noise_embedding.1}
  #allocation0 [shape = 'u32[]', space=smem, size = 0x4, offset = 0x4, fixed_abs, tag = 'smem constant byte address 0x4 - core index']
  #allocation1 [shape = 'u32[144,128]{1,0:T(1,128)}', space=vmem, size = 0x12000, scoped, tag = 'internal scratch']
  %s0 = inlined_call_operand.vmem [shape: f32[16,1], index: 0, kind: input, shape index: {}]
  %s1 = inlined_call_operand.vmem [shape: f32[2,128], index: 1, kind: input, shape index: {}]
  %s2 = inlined_call_operand.hbm [shape: f32[16,128], index: 2, kind: output, shape index: {}]
  %s3 = sld [smem:[#allocation0]]
  $region18: #{fourier_noise_embedding.1} parent=0
    _
  %s5 = ssub.s32 1, %s3
  %s6 = scalar_select 0, %s5, %s3
  $region1: #{fourier_noise_embedding.1} parent=0
    #allocation2 [shape = 'u8[8192]{0}', space=vmem, size = 0x2000, scoped, tag = 'output window, operand 0, single buffered']
    #allocation3 [shape = 's32[1]{0}', space=sflag, size = 0x4, scoped, tag = 'scoped memory for fourier_noise_embedding.1']
    %7 = vsyncpa [#allocation3], 0
    // Predicated region
    $region2: #{fourier_noise_embedding.1} parent=1 // pred_check
      _
    $region3: #{fourier_noise_embedding.1} parent=1 // pred_check_branch
      %9 = sbr.rel (0) target = $region5
    $region4: #{fourier_noise_embedding.1} parent=1 // pred_region
      _
    $region5: #{fourier_noise_embedding.1} parent=1 // pred_fallthru
      _
    // Predicated region
    $region6: #{fourier_noise_embedding.1} parent=1 // pred_check
      _
    $region7: #{fourier_noise_embedding.1} parent=1 // pred_check_branch
      %11 = sbr.rel (0) target = $region9
    $region8: #{fourier_noise_embedding.1} parent=1 // pred_region
      _
    $region9: #{fourier_noise_embedding.1} parent=1 // pred_fallthru
      _
    %v12 = vld [vmem:[%s0] sm:$0xff]
    %v13 = vld [vmem:[%s0 + $0x8] sm:$0xff]
    %v14 = vld [vmem:[%s1] sm:$0x1]
    %v15 = vld [vmem:[%s1 + $0x1] sm:$0x1]
    %17 = vset.pattern.permute.xlu0 0
    %18 = vperm.xlu0 %17, %v12
    %v19 = vpop.permute.xlu0 %18
    %22 = vset.pattern.permute.xlu0 0
    %23 = vperm.xlu0 %22, %v13
    %v24 = vpop.permute.xlu0 %23
    %v26 = vlaneseq
    %v27 = vshrl.u32 %v26, 7
    %v28 = vsub.s32 0, %v27
    %v29 = vrot.slane %v14, %v28
    %v30 = vmul.f32 %v19, %v29
    %v31 = vmul.f32 %v24, %v29
    %v32 = vlaneseq
    %v33 = vshrl.u32 %v32, 7
    %v34 = vsub.s32 0, %v33
    %v35 = vrot.slane %v15, %v34
    %v36 = vadd.f32 %v30, %v35
    %v37 = vadd.f32 %v31, %v35
    %v38 = vand.u32 2147483647, %v36
    %vm39 = vcmp.le.f32.partialorder %v38, 0.7853982
    %vm40 = vcmp.lt.s32.totalorder %v36, 0
    %v41 = vand.u32 %v36, 2139095040
    %v42 = vshrl.u32 %v41, 23
    %v43 = vsub.s32 %v42, 127
    %v44 = vand.u32 2147483647, %v36
    %v45 = vand.u32 %v44, 8388607
    %v46 = vor.u32 %v45, 8388608
    %v47 = vsub.s32 0, %v46
    %v48 = vadd.s32 %v43, 1
    %vm49 = vcmp.gt.s32.totalorder %v48, 0
    %v50 = vsel %vm49, %v48, 0
    %v51 = vshrl.u32 %v50, 5
    %v52 = vand.u32 %v50, 31
    %v53 = vsub.s32 32, %v52
    %v54 = vshrl.u32 683565275, %v53
    %v55 = vshll.u32 683565275, %v52
    %v56 = vshrl.u32 2475754826, %v53
    %v57 = vor.u32 %v55, %v56
    %v58 = vshll.u32 2475754826, %v52
    %v59 = vshrl.u32 2131351028, %v53
    %v60 = vor.u32 %v58, %v59
    %v61 = vshll.u32 2131351028, %v52
    %v62 = vshrl.u32 2102212464, %v53
    %v63 = vor.u32 %v61, %v62
    %v64 = vshll.u32 2102212464, %v52
    %v65 = vshrl.u32 920167782, %v53
    %v66 = vor.u32 %v64, %v65
    %v67 = vshll.u32 920167782, %v52
    %v68 = vshrl.u32 1326507024, %v53
    %v69 = vor.u32 %v67, %v68
    %vm70 = vcmp.lt.s32.totalorder %v51, 1
    %vm71 = vcmp.lt.s32.totalorder %v51, 2
    %vm72 = vcmp.lt.s32.totalorder %v51, 3
    %vm73 = vcmp.lt.s32.totalorder %v51, 4
    %v74 = vsel %vm70, %v54, %v57
    %v75 = vsel %vm73, %v63, 2102212464
    %v76 = vsel %vm72, %v60, %v75
    %v77 = vsel %vm71, %v74, %v76
    %v78 = vsel %vm70, %v57, %v60
    %v79 = vsel %vm73, %v66, 920167782
    %v80 = vsel %vm72, %v63, %v79
    %v81 = vsel %vm71, %v78, %v80
    %v82 = vsel %vm70, %v60, %v63
    %v83 = vsel %vm73, %v69, 1326507024
    %v84 = vsel %vm72, %v66, %v83
    %v85 = vsel %vm71, %v82, %v84
    %v86 = vshll.u32 %v46, 8
    %v87 = vmul.u32.u64.compose %v86, %v85
    %v88 = vextract.low.u32 %v87
    %v89 = vextract.high.u32 %v87
    %v90 = vmul.u32.u64.compose %v86, %v81
    %v91 = vextract.low.u32 %v90
    %v92 = vextract.high.u32 %v90
    %v93 = vmul.u32 %v86, %v77
    %v94 = vadd.s32 %v89, %v91
    %vm95 = vc.u32 %v89, %v91
    %v96 = vadd.s32 %v92, 1
    %v97 = vsel %vm95, %v96, %v92
    %v98 = vadd.s32 %v93, %v97
    %v99 = vadd.s32 %v98, 536870912
    %v100 = vshrl.u32 %v99, 30
    %v101 = vshll.u32 %v100, 30
    %v102 = vsub.s32 %v98, %v101
    %vm103 = vcmp.lt.s32.totalorder %v102, 0
    %v104 = vsub.s32 0, %v102
    %v105 = vsel %vm103, %v104, %v102
    %v106 = vclz %v105
    %v107 = vsub.s32 %v106, 2
    %vm108 = vcmp.gt.s32.totalorder 0, %v107
    %v109 = vsel %vm108, 0, %v107
    %v110 = vsub.s32 32, %v109
    %v111 = vshll.u32 %v102, %v109
    %v112 = vshrl.u32 %v94, %v110
    %v113 = vor.u32 %v111, %v112
    %v114 = vsub.s32 4294967266, %v109
    %v115 = vadd.s32 %v114, 127
    %v116 = vshll.u32 %v115, 23
    %v117 = vor.u32 4788187, %v116
    %v118 = vand.u32 2147483647, %v117
    %v120 = vcvt.s32.f32 %v113
    %v121 = vmul.f32 %v120, %v118
    %v122 = vxor.u32 %v121, 2147483648
    %v123 = vsel %vm40, %v122, %v121
    %v124 = vsub.s32 4, %v100
    %v125 = vsel %vm40, %v124, %v100
    %v126 = vsel %vm39, %v36, %v123
    %v127 = vsel %vm39, 0, %v125
    %v128 = vcosq.f32.pop %v126
    %v129 = vsinq.f32.pop %v126
    %vm130 = vweird.f32 %v36
    %v131 = vand.u32 %v127, 3
    %vm132 = vcmp.lt.s32.totalorder %v131, 2
    %vm133 = vcmp.eq.s32.totalorder %v131, 0
    %v134 = vxor.u32 %v129, 2147483648
    %v135 = vsel %vm133, %v128, %v134
    %vm136 = vcmp.eq.s32.totalorder %v131, 2
    %v137 = vxor.u32 %v128, 2147483648
    %v138 = vsel %vm136, %v137, %v129
    %v139 = vsel %vm132, %v135, %v138
    %v140 = vsel %vm130, nan, %v139
    %v141 = vand.u32 2147483647, %v37
    %vm142 = vcmp.le.f32.partialorder %v141, 0.7853982
    %vm143 = vcmp.lt.s32.totalorder %v37, 0
    %v144 = vand.u32 %v37, 2139095040
    %v145 = vshrl.u32 %v144, 23
    %v146 = vsub.s32 %v145, 127
    %v147 = vand.u32 2147483647, %v37
    %v148 = vand.u32 %v147, 8388607
    %v149 = vor.u32 %v148, 8388608
    %v150 = vsub.s32 0, %v149
    %v151 = vadd.s32 %v146, 1
    %vm152 = vcmp.gt.s32.totalorder %v151, 0
    %v153 = vsel %vm152, %v151, 0
    %v154 = vshrl.u32 %v153, 5
    %v155 = vand.u32 %v153, 31
    %v156 = vsub.s32 32, %v155
    %v157 = vshrl.u32 683565275, %v156
    %v158 = vshll.u32 683565275, %v155
    %v159 = vshrl.u32 2475754826, %v156
    %v160 = vor.u32 %v158, %v159
    %v161 = vshll.u32 2475754826, %v155
    %v162 = vshrl.u32 2131351028, %v156
    %v163 = vor.u32 %v161, %v162
    %v164 = vshll.u32 2131351028, %v155
    %v165 = vshrl.u32 2102212464, %v156
    %v166 = vor.u32 %v164, %v165
    %v167 = vshll.u32 2102212464, %v155
    %v168 = vshrl.u32 920167782, %v156
    %v169 = vor.u32 %v167, %v168
    %v170 = vshll.u32 920167782, %v155
    %v171 = vshrl.u32 1326507024, %v156
    %v172 = vor.u32 %v170, %v171
    %vm173 = vcmp.lt.s32.totalorder %v154, 1
    %vm174 = vcmp.lt.s32.totalorder %v154, 2
    %vm175 = vcmp.lt.s32.totalorder %v154, 3
    %vm176 = vcmp.lt.s32.totalorder %v154, 4
    %v177 = vsel %vm173, %v157, %v160
    %v178 = vsel %vm176, %v166, 2102212464
    %v179 = vsel %vm175, %v163, %v178
    %v180 = vsel %vm174, %v177, %v179
    %v181 = vsel %vm173, %v160, %v163
    %v182 = vsel %vm176, %v169, 920167782
    %v183 = vsel %vm175, %v166, %v182
    %v184 = vsel %vm174, %v181, %v183
    %v185 = vsel %vm173, %v163, %v166
    %v186 = vsel %vm176, %v172, 1326507024
    %v187 = vsel %vm175, %v169, %v186
    %v188 = vsel %vm174, %v185, %v187
    %v189 = vshll.u32 %v149, 8
    %v190 = vmul.u32.u64.compose %v189, %v188
    %v191 = vextract.low.u32 %v190
    %v192 = vextract.high.u32 %v190
    %v193 = vmul.u32.u64.compose %v189, %v184
    %v194 = vextract.low.u32 %v193
    %v195 = vextract.high.u32 %v193
    %v196 = vmul.u32 %v189, %v180
    %v197 = vadd.s32 %v192, %v194
    %vm198 = vc.u32 %v192, %v194
    %v199 = vadd.s32 %v195, 1
    %v200 = vsel %vm198, %v199, %v195
    %v201 = vadd.s32 %v196, %v200
    %v202 = vadd.s32 %v201, 536870912
    %v203 = vshrl.u32 %v202, 30
    %v204 = vshll.u32 %v203, 30
    %v205 = vsub.s32 %v201, %v204
    %vm206 = vcmp.lt.s32.totalorder %v205, 0
    %v207 = vsub.s32 0, %v205
    %v208 = vsel %vm206, %v207, %v205
    %v209 = vclz %v208
    %v210 = vsub.s32 %v209, 2
    %vm211 = vcmp.gt.s32.totalorder 0, %v210
    %v212 = vsel %vm211, 0, %v210
    %v213 = vsub.s32 32, %v212
    %v214 = vshll.u32 %v205, %v212
    %v215 = vshrl.u32 %v197, %v213
    %v216 = vor.u32 %v214, %v215
    %v217 = vsub.s32 4294967266, %v212
    %v218 = vadd.s32 %v217, 127
    %v219 = vshll.u32 %v218, 23
    %v220 = vor.u32 4788187, %v219
    %v221 = vand.u32 2147483647, %v220
    %v223 = vcvt.s32.f32 %v216
    %v224 = vmul.f32 %v223, %v221
    %v225 = vxor.u32 %v224, 2147483648
    %v226 = vsel %vm143, %v225, %v224
    %v227 = vsub.s32 4, %v203
    %v228 = vsel %vm143, %v227, %v203
    %v229 = vsel %vm142, %v37, %v226
    %v230 = vsel %vm142, 0, %v228
    %v231 = vcosq.f32.pop %v229
    %v232 = vsinq.f32.pop %v229
    %vm233 = vweird.f32 %v37
    %v234 = vand.u32 %v230, 3
    %vm235 = vcmp.lt.s32.totalorder %v234, 2
    %vm236 = vcmp.eq.s32.totalorder %v234, 0
    %v237 = vxor.u32 %v232, 2147483648
    %v238 = vsel %vm236, %v231, %v237
    %vm239 = vcmp.eq.s32.totalorder %v234, 2
    %v240 = vxor.u32 %v231, 2147483648
    %v241 = vsel %vm239, %v240, %v232
    %v242 = vsel %vm235, %v238, %v241
    %v243 = vsel %vm233, nan, %v242
    %244 = vst [vmem:[#allocation2] sm:$0xff] %v140
    %245 = vst [vmem:[#allocation2 + $0x8] sm:$0xff] %v243
    // Predicated region
    $region10: #{fourier_noise_embedding.1} parent=1 // pred_check
      _
    $region11: #{fourier_noise_embedding.1} parent=1 // pred_check_branch
      %247 = sbr.rel (0) target = $region13
    $region12: #{fourier_noise_embedding.1} parent=1 // pred_region
      %s249 = ssub.s32 256, 256
      %250 = vsyncadd [#allocation3], %s249
      %s251 = sshll.u32 [#allocation2], 4
      %s252 = int_to_ptr.vmem [resolvable:$true] %s251
      %257 = dma.vmem_to_hbm [thread:$0]  %s252, 256, %s2, [#allocation3], 128, 128, 8
    $region13: #{fourier_noise_embedding.1} parent=1 // pred_fallthru
      _
    // Predicated region
    $region14: #{fourier_noise_embedding.1} parent=1 // pred_check
      _
    $region15: #{fourier_noise_embedding.1} parent=1 // pred_check_branch
      %259 = sbr.rel (0) target = $region17
    $region16: #{fourier_noise_embedding.1} parent=1 // pred_region
      %260 = dma.done [#allocation3], 256
    $region17: #{fourier_noise_embedding.1} parent=1 // pred_fallthru
      _
    %261 = vsyncpa [#allocation3], 1

</llo_original>
